<compile_context>
chip_gen: v7x
topology: tpu7x:2x2x1
jax: 0.10.0
libtpu: 0.0.40
codegen_flags: <defaults>
</compile_context>

<pallas_src>
import numpy as np
import jax
import jax.numpy as jnp
from jax import lax
from jax.experimental import pallas as pl
from jax.experimental.pallas import tpu as pltpu

KH = KW = 3
PAD = 1
NUM_PRIMS = 4                 # [skip_connect, conv1x1, conv3x3, avg_pool3x3]


def _make_mixed_op_kernel(C, ntaps, center_tap):
    """Fused DARTS mixed-op, single invocation, everything VMEM-resident.

    alpha_ref:   (1, NUM_PRIMS)  raw architecture logits
    w3t_ref:     (C, K)          3x3 conv weight, rows Cout, cols (dy, dx, cin)
    w1t_ref:     (C, C)          1x1 conv weight (Cout, Cin)
    invcnt_ref:  (1, N)          1/valid-window-count per output position
    patches_ref: (K, N)          im2col patches, rows (dy, dx, cin), cols (b, h, w)
    o_ref:       (C, N)          mixed output (transposed; wrapper -> NCHW)
    """
    def kernel(alpha_ref, w3t_ref, w1t_ref, invcnt_ref, patches_ref, o_ref):
        # ---- softmax over the 4 logits, in-kernel (EUP is otherwise idle) ----
        a = alpha_ref[...]                                        # (1, 4)
        e = jnp.exp(a - jnp.max(a, axis=-1, keepdims=True))
        coef = e / jnp.sum(e, axis=-1, keepdims=True)             # (1, 4)
        c_skip = coef[:, 0:1]                                     # (1, 1) each
        c_conv1 = coef[:, 1:2]
        c_conv3 = coef[:, 2:3]
        c_pool = coef[:, 3:4]

        patches = patches_ref[...]                                # (K, N)
        ctr = patches[center_tap * C:(center_tap + 1) * C, :]     # skip tap (C, N)

        # MXU: fused 3x3 conv over all taps; tiny 1x1 conv on the center tap.
        conv3 = jnp.dot(w3t_ref[...], patches,
                        preferred_element_type=jnp.float32)       # (C, N)
        conv1 = jnp.dot(w1t_ref[...], ctr,
                        preferred_element_type=jnp.float32)       # (C, N)

        # VPU: 3x3 window SUM = sum of the 9 channel blocks (avg-pool numerator).
        pool_sum = patches[0:C, :]
        for t in range(1, ntaps):
            pool_sum = pool_sum + patches[t * C:(t + 1) * C, :]

        out = (c_skip * ctr + c_conv1 * conv1 + c_conv3 * conv3
               + (c_pool * invcnt_ref[...]) * pool_sum)
        o_ref[...] = out.astype(o_ref.dtype)

    return kernel


@jax.jit
def mixed_op_forward(x_nchw, w3_oihw, w1_oihw, alpha):
    """NCHW in/out, conv weights in PyTorch OIHW layout, alpha = arch logits."""
    B, C, H, W = x_nchw.shape
    K = KH * KW * C
    N = B * H * W
    ntaps = KH * KW
    center_tap = PAD * KW + PAD                                   # (dy=1, dx=1)

    # ---- im2col built directly in (K, N): rows (dy,dx,cin), cols (b,h,w) ----
    xc = jnp.transpose(x_nchw, (1, 0, 2, 3))                      # (C, B, H, W)
    xp = jnp.pad(xc, ((0, 0), (0, 0), (PAD, PAD), (PAD, PAD)))
    patches = jnp.concatenate(
        [xp[:, :, dy:dy + H, dx:dx + W].reshape(C, N)
         for dy in range(KH) for dx in range(KW)], axis=0)        # (K, N)

    # ---- weights in matmul-ready layout (tiny, layout-only) -----------------
    w3t = jnp.transpose(w3_oihw, (0, 2, 3, 1)).reshape(C, K)      # (Cout, dy,dx,cin)
    w1t = w1_oihw[:, :, 0, 0]                                     # (Cout, Cin)

    # ---- count_include_pad=False divisor map: trace-time numpy constant -----
    ones = np.zeros((H + 2 * PAD, W + 2 * PAD), np.float32)
    ones[PAD:PAD + H, PAD:PAD + W] = 1.0
    count = sum(ones[dy:dy + H, dx:dx + W]
                for dy in range(KH) for dx in range(KW))          # (H, W): 4/6/9
    invcnt = jnp.asarray(
        np.tile((1.0 / count).reshape(-1), B).reshape(1, N))      # (1, N), (b,h,w)

    alpha2d = alpha.reshape(1, NUM_PRIMS).astype(jnp.float32)

    out_t = pl.pallas_call(
        _make_mixed_op_kernel(C, ntaps, center_tap),
        out_shape=jax.ShapeDtypeStruct((C, N), x_nchw.dtype),
        in_specs=[pl.BlockSpec(memory_space=pltpu.MemorySpace.VMEM)] * 5,
        out_specs=pl.BlockSpec(memory_space=pltpu.MemorySpace.VMEM),
    )(alpha2d, w3t, w1t, invcnt, patches)

    # (C, B*H*W) -> (C, B, H, W) -> NCHW
    return jnp.transpose(out_t.reshape(C, B, H, W), (1, 0, 2, 3))


def reference_forward(x_nchw, w3_oihw, w1_oihw, alpha):
    """Plain-JAX reference matching PyTorch MixedOp semantics
    (AvgPool2d(3, 1, 1, count_include_pad=False))."""
    B, C, H, W = x_nchw.shape
    coef = jax.nn.softmax(alpha)
    dn = ("NCHW", "OIHW", "NCHW")
    conv3 = lax.conv_general_dilated(x_nchw, w3_oihw, (1, 1), [(1, 1), (1, 1)],
                                     dimension_numbers=dn)
    conv1 = lax.conv_general_dilated(x_nchw, w1_oihw, (1, 1), [(0, 0), (0, 0)],
                                     dimension_numbers=dn)
    xp = jnp.pad(x_nchw, ((0, 0), (0, 0), (PAD, PAD), (PAD, PAD)))
    pool_sum = sum(xp[:, :, dy:dy + H, dx:dx + W]
                   for dy in range(KH) for dx in range(KW))
    onesp = jnp.pad(jnp.ones((H, W), x_nchw.dtype), PAD)
    count = sum(onesp[dy:dy + H, dx:dx + W]
                for dy in range(KH) for dx in range(KW))
    pool = pool_sum / count
    return (coef[0] * x_nchw + coef[1] * conv1
            + coef[2] * conv3 + coef[3] * pool)


if __name__ == "__main__":
    B, C, H, W = 2, 4, 16, 16
    key = jax.random.PRNGKey(0)
    kx, kw3, kw1, ka = jax.random.split(key, 4)

    x = jax.random.normal(kx, (B, C, H, W), jnp.float32)            # NCHW input
    w3 = jax.random.normal(kw3, (C, C, KH, KW), jnp.float32) * 0.1  # OIHW 3x3
    w1 = jax.random.normal(kw1, (C, C, 1, 1), jnp.float32) * 0.1    # OIHW 1x1
    alpha = jax.random.normal(ka, (NUM_PRIMS,), jnp.float32)        # arch logits

    out = jax.block_until_ready(mixed_op_forward(x, w3, w1, alpha))
    ref = reference_forward(x, w3, w1, alpha)

    assert out.shape == (B, C, H, W)
    assert jnp.allclose(out, ref, atol=1e-4, rtol=1e-4), "mismatch vs reference"
    print("KERNEL_OK")
</pallas_src>

<mosaic_0001>
module attributes {stable_mosaic.version = 11 : i64} {
  func.func @kernel(%arg0: memref<1x4xf32, #tpu.memory_space<vmem>>, %arg1: memref<4x36xf32, #tpu.memory_space<vmem>>, %arg2: memref<4x4xf32, #tpu.memory_space<vmem>>, %arg3: memref<1x512xf32, #tpu.memory_space<vmem>>, %arg4: memref<36x512xf32, #tpu.memory_space<vmem>>, %arg5: memref<4x512xf32, #tpu.memory_space<vmem>>) attributes {dimension_semantics = [], scalar_prefetch = 0 : i64, scratch_operands = 0 : i64, tpu.core_type = #tpu.core_type<tc>} {
    %c0 = arith.constant 0 : index
    %c0_0 = arith.constant 0 : index
    %0 = vector.load %arg0[%c0, %c0_0] : memref<1x4xf32, #tpu.memory_space<vmem>>, vector<1x4xf32>
    %cst = arith.constant dense<0xFF800000> : vector<1xf32>
    %1 = vector.multi_reduction <maximumf>, %0, %cst [1] : vector<1x4xf32> to vector<1xf32>
    %2 = vector.shape_cast %1 : vector<1xf32> to vector<1x1xf32>
    %3 = vector.broadcast %2 : vector<1x1xf32> to vector<1x4xf32>
    %4 = arith.subf %0, %3 : vector<1x4xf32>
    %5 = math.exp %4 : vector<1x4xf32>
    %cst_1 = arith.constant dense<0.000000e+00> : vector<1xf32>
    %6 = vector.multi_reduction <add>, %5, %cst_1 [1] : vector<1x4xf32> to vector<1xf32>
    %7 = vector.shape_cast %6 : vector<1xf32> to vector<1x1xf32>
    %8 = vector.broadcast %7 : vector<1x1xf32> to vector<1x4xf32>
    %9 = arith.divf %5, %8 : vector<1x4xf32>
    %10 = vector.extract_strided_slice %9 {offsets = [0, 0], sizes = [1, 1], strides = [1, 1]} : vector<1x4xf32> to vector<1x1xf32>
    %11 = vector.extract_strided_slice %9 {offsets = [0, 1], sizes = [1, 1], strides = [1, 1]} : vector<1x4xf32> to vector<1x1xf32>
    %12 = vector.extract_strided_slice %9 {offsets = [0, 2], sizes = [1, 1], strides = [1, 1]} : vector<1x4xf32> to vector<1x1xf32>
    %13 = vector.extract_strided_slice %9 {offsets = [0, 3], sizes = [1, 1], strides = [1, 1]} : vector<1x4xf32> to vector<1x1xf32>
    %c0_2 = arith.constant 0 : index
    %c0_3 = arith.constant 0 : index
    %14 = vector.load %arg4[%c0_2, %c0_3] : memref<36x512xf32, #tpu.memory_space<vmem>>, vector<36x512xf32>
    %15 = vector.extract_strided_slice %14 {offsets = [16, 0], sizes = [4, 512], strides = [1, 1]} : vector<36x512xf32> to vector<4x512xf32>
    %c0_4 = arith.constant 0 : index
    %c0_5 = arith.constant 0 : index
    %16 = vector.load %arg1[%c0_4, %c0_5] : memref<4x36xf32, #tpu.memory_space<vmem>>, vector<4x36xf32>
    %cst_6 = arith.constant dense<0.000000e+00> : vector<4x512xf32>
    %17 = tpu.matmul %16, %14, %cst_6 {dimension_numbers = #tpu.dot_dimension_numbers<[1], [0], [0], [1], [0, 0, 1, 1], [], []>} : vector<4x36xf32>, vector<36x512xf32>, vector<4x512xf32> -> vector<4x512xf32>
    %c0_7 = arith.constant 0 : index
    %c0_8 = arith.constant 0 : index
    %18 = vector.load %arg2[%c0_7, %c0_8] : memref<4x4xf32, #tpu.memory_space<vmem>>, vector<4x4xf32>
    %cst_9 = arith.constant dense<0.000000e+00> : vector<4x512xf32>
    %19 = tpu.matmul %18, %15, %cst_9 {dimension_numbers = #tpu.dot_dimension_numbers<[1], [0], [0], [1], [0, 0, 1, 1], [], []>} : vector<4x4xf32>, vector<4x512xf32>, vector<4x512xf32> -> vector<4x512xf32>
    %20 = vector.extract_strided_slice %14 {offsets = [0, 0], sizes = [4, 512], strides = [1, 1]} : vector<36x512xf32> to vector<4x512xf32>
    %21 = vector.extract_strided_slice %14 {offsets = [4, 0], sizes = [4, 512], strides = [1, 1]} : vector<36x512xf32> to vector<4x512xf32>
    %22 = arith.addf %20, %21 : vector<4x512xf32>
    %23 = vector.extract_strided_slice %14 {offsets = [8, 0], sizes = [4, 512], strides = [1, 1]} : vector<36x512xf32> to vector<4x512xf32>
    %24 = arith.addf %22, %23 : vector<4x512xf32>
    %25 = vector.extract_strided_slice %14 {offsets = [12, 0], sizes = [4, 512], strides = [1, 1]} : vector<36x512xf32> to vector<4x512xf32>
    %26 = arith.addf %24, %25 : vector<4x512xf32>
    %27 = vector.extract_strided_slice %14 {offsets = [16, 0], sizes = [4, 512], strides = [1, 1]} : vector<36x512xf32> to vector<4x512xf32>
    %28 = arith.addf %26, %27 : vector<4x512xf32>
    %29 = vector.extract_strided_slice %14 {offsets = [20, 0], sizes = [4, 512], strides = [1, 1]} : vector<36x512xf32> to vector<4x512xf32>
    %30 = arith.addf %28, %29 : vector<4x512xf32>
    %31 = vector.extract_strided_slice %14 {offsets = [24, 0], sizes = [4, 512], strides = [1, 1]} : vector<36x512xf32> to vector<4x512xf32>
    %32 = arith.addf %30, %31 : vector<4x512xf32>
    %33 = vector.extract_strided_slice %14 {offsets = [28, 0], sizes = [4, 512], strides = [1, 1]} : vector<36x512xf32> to vector<4x512xf32>
    %34 = arith.addf %32, %33 : vector<4x512xf32>
    %35 = vector.extract_strided_slice %14 {offsets = [32, 0], sizes = [4, 512], strides = [1, 1]} : vector<36x512xf32> to vector<4x512xf32>
    %36 = arith.addf %34, %35 : vector<4x512xf32>
    %37 = vector.broadcast %10 : vector<1x1xf32> to vector<4x512xf32>
    %38 = arith.mulf %37, %15 : vector<4x512xf32>
    %39 = vector.broadcast %11 : vector<1x1xf32> to vector<4x512xf32>
    %40 = arith.mulf %39, %19 : vector<4x512xf32>
    %41 = arith.addf %38, %40 : vector<4x512xf32>
    %42 = vector.broadcast %12 : vector<1x1xf32> to vector<4x512xf32>
    %43 = arith.mulf %42, %17 : vector<4x512xf32>
    %44 = arith.addf %41, %43 : vector<4x512xf32>
    %c0_10 = arith.constant 0 : index
    %c0_11 = arith.constant 0 : index
    %45 = vector.load %arg3[%c0_10, %c0_11] : memref<1x512xf32, #tpu.memory_space<vmem>>, vector<1x512xf32>
    %46 = vector.broadcast %13 : vector<1x1xf32> to vector<1x512xf32>
    %47 = arith.mulf %46, %45 : vector<1x512xf32>
    %48 = vector.broadcast %47 : vector<1x512xf32> to vector<4x512xf32>
    %49 = arith.mulf %48, %36 : vector<4x512xf32>
    %50 = arith.addf %44, %49 : vector<4x512xf32>
    %c0_12 = arith.constant 0 : index
    %c0_13 = arith.constant 0 : index
    %51 = vector.load %arg5[%c0_12, %c0_13] : memref<4x512xf32, #tpu.memory_space<vmem>>, vector<4x512xf32>
    tpu.vector_store %arg5[%c0_12, %c0_13], %50 {strides = array<i32>} : memref<4x512xf32, #tpu.memory_space<vmem>>, vector<4x512xf32>,
    return
  }
}

</mosaic_0001>

<llo_original>
// kernel: mixed_op_forward.1
$region0: #{mixed_op_forward.1}
  #allocation0 [shape = 'u32[]', space=smem, size = 0x4, offset = 0x4, fixed_abs, tag = 'smem constant byte address 0x4 - core index']
  #allocation1 [shape = 'u32[144,128]{1,0:T(1,128)}', space=vmem, size = 0x12000, scoped, tag = 'internal scratch']
  %s0 = inlined_call_operand.vmem [shape: f32[1,4], index: 0, kind: input, shape index: {}]
  %s1 = inlined_call_operand.vmem [shape: f32[4,36], index: 1, kind: input, shape index: {}]
  %s2 = inlined_call_operand.vmem [shape: f32[4,4], index: 2, kind: input, shape index: {}]
  %s3 = inlined_call_operand.vmem [shape: f32[1,512], index: 3, kind: input, shape index: {}]
  %s4 = inlined_call_operand.vmem [shape: f32[36,512], index: 4, kind: input, shape index: {}]
  %s5 = inlined_call_operand.vmem [shape: f32[4,512], index: 5, kind: output, shape index: {}]
  %s6 = sld [smem:[#allocation0]]
  $region30: #{mixed_op_forward.1} parent=0
    _
  %s8 = ssub.s32 1, %s6
  %s9 = scalar_select 0, %s8, %s6
  // Predicated region
  $region2: #{mixed_op_forward.1} parent=0 // pred_check
    _
  $region3: #{mixed_op_forward.1} parent=0 // pred_check_branch
    %11 = sbr.rel (0) target = $region5
  $region4: #{mixed_op_forward.1} parent=0 // pred_region
    _
  $region5: #{mixed_op_forward.1} parent=0 // pred_fallthru
    _
  // Predicated region
  $region6: #{mixed_op_forward.1} parent=0 // pred_check
    _
  $region7: #{mixed_op_forward.1} parent=0 // pred_check_branch
    %13 = sbr.rel (0) target = $region9
  $region8: #{mixed_op_forward.1} parent=0 // pred_region
    _
  $region9: #{mixed_op_forward.1} parent=0 // pred_fallthru
    _
  // Predicated region
  $region10: #{mixed_op_forward.1} parent=0 // pred_check
    _
  $region11: #{mixed_op_forward.1} parent=0 // pred_check_branch
    %15 = sbr.rel (0) target = $region13
  $region12: #{mixed_op_forward.1} parent=0 // pred_region
    _
  $region13: #{mixed_op_forward.1} parent=0 // pred_fallthru
    _
  // Predicated region
  $region14: #{mixed_op_forward.1} parent=0 // pred_check
    _
  $region15: #{mixed_op_forward.1} parent=0 // pred_check_branch
    %17 = sbr.rel (0) target = $region17
  $region16: #{mixed_op_forward.1} parent=0 // pred_region
    _
  $region17: #{mixed_op_forward.1} parent=0 // pred_fallthru
    _
  // Predicated region
  $region18: #{mixed_op_forward.1} parent=0 // pred_check
    _
  $region19: #{mixed_op_forward.1} parent=0 // pred_check_branch
    %19 = sbr.rel (0) target = $region21
  $region20: #{mixed_op_forward.1} parent=0 // pred_region
    _
  $region21: #{mixed_op_forward.1} parent=0 // pred_fallthru
    _
  %v20 = vld [vmem:[%s0] sm:$0x1]
  %vm21 = vcmask 24576
  %v22 = vsel %vm21, %v20, -inf
  %23 = vmax.xlane.f32.xlu0 %v22
  %v24 = vpop.xlane.xlu0 %23
  %v25 = vsub.f32 %v20, %v24
  %v26 = vmul.f32 %v25, 1.442695
  %v27 = vpow.pop %v26
  %v28 = vsel %vm21, %v27, 0.0
  %29 = vadd.xlane.f32.xlu0 %v28
  %v30 = vpop.xlane.xlu0 %29
  %v31 = vrcp.pop %v30
  %v32 = vmul.f32 %v27, %v31
  %v33 = vld [vmem:[%s4] sm:$0xff]
  %v34 = vld [vmem:[%s4 + $0x8] sm:$0xff]
  %v35 = vld [vmem:[%s4 + $0x10] sm:$0xff]
  %v36 = vld [vmem:[%s4 + $0x18] sm:$0xff]
  %v37 = vld [vmem:[%s4 + $0x20] sm:$0xff]
  %v38 = vld [vmem:[%s4 + $0x28] sm:$0xff]
  %v39 = vld [vmem:[%s4 + $0x30] sm:$0xff]
  %v40 = vld [vmem:[%s4 + $0x38] sm:$0xff]
  %v41 = vld [vmem:[%s4 + $0x40] sm:$0xff]
  %v42 = vld [vmem:[%s4 + $0x48] sm:$0xff]
  %v43 = vld [vmem:[%s4 + $0x50] sm:$0xff]
  %v44 = vld [vmem:[%s4 + $0x58] sm:$0xff]
  %v45 = vld [vmem:[%s4 + $0x60] sm:$0xff]
  %v46 = vld [vmem:[%s4 + $0x68] sm:$0xff]
  %v47 = vld [vmem:[%s4 + $0x70] sm:$0xff]
  %v48 = vld [vmem:[%s4 + $0x78] sm:$0xff]
  %v49 = vld [vmem:[%s4 + $0x80] sm:$0xf]
  %v50 = vld [vmem:[%s4 + $0x88] sm:$0xf]
  %v51 = vld [vmem:[%s4 + $0x90] sm:$0xf]
  %v52 = vld [vmem:[%s4 + $0x98] sm:$0xf]
  %v53 = vld [vmem:[%s1] sm:$0xf]
  %vm54 = vcmask 293888
  %v56 = vsel %vm54, %v53, 0
  %vm58 = vcmask 1043456
  %v60 = vsel %vm58, %v49, 0
  %v63 = vsel %vm58, %v50, 0
  %v66 = vsel %vm58, %v51, 0
  %v69 = vsel %vm58, %v52, 0
  %71 = vmatprep.subr.mxu0 %v34
  %72 = vmatpush1.msra.mxu0 %v33
  %73 = vmatprep.subr.mxu0 %v38
  %74 = vmatpush1.msra.mxu0 %v37
  %75 = vmatprep.subr.mxu0 %v42
  %76 = vmatpush1.msra.mxu0 %v41
  %77 = vmatprep.subr.mxu0 %v46
  %78 = vmatpush1.msra.mxu0 %v45
  %79 = vmatprep.subr.mxu0 %v63
  %80 = vmatpush1.msra.mxu0 %v60
  %81 = vmatprep.subr.mxu0 0.0
  %82 = vmatpush1.msra.mxu0 0.0
  %83 = vmatprep.subr.mxu0 0.0
  %84 = vmatpush1.msra.mxu0 0.0
  %85 = vmatprep.subr.mxu0 0.0
  %86 = vmatpush1.msra.mxu0 0.0
  %87 = vmatprep.subr.mxu0 0.0
  %88 = vmatpush1.msra.mxu0 0.0
  %89 = vmatprep.subr.mxu0 0.0
  %90 = vmatpush1.msra.mxu0 0.0
  %91 = vmatprep.subr.mxu0 0.0
  %92 = vmatpush1.msra.mxu0 0.0
  %93 = vmatprep.subr.mxu0 0.0
  %94 = vmatpush1.msra.mxu0 0.0
  %95 = vmatprep.subr.mxu0 0.0
  %96 = vmatpush1.msra.mxu0 0.0
  %97 = vmatprep.subr.mxu0 0.0
  %98 = vmatpush1.msra.mxu0 0.0
  %99 = vmatprep.subr.mxu0 0.0
  %100 = vmatpush1.msra.mxu0 0.0
  %101 = vmatprep.subr.mxu0 0.0
  %102 = vmatpush1.msra.mxu0 0.0
  %103 = vmatprep.subr.mxu0 0.0
  %104 = vmatpush1.msra.mxu0 0.0
  %105 = vmatprep.subr.mxu0 0.0
  %106 = vmatpush1.msra.mxu0 0.0
  %107 = vmatprep.subr.mxu0 0.0
  %108 = vmatpush1.msra.mxu0 0.0
  %109 = vmatprep.subr.mxu0 0.0
  %110 = vmatpush1.msra.mxu0 0.0
  %111 = vmatprep.subr.mxu0 0.0
  %112 = vmatpush1.msra.mxu0 0.0
  %113 = vmatprep.subr.mxu0 0.0
  %114 = vmatpush1.msra.mxu0 0.0
  %115 = vmatprep.subr.mxu0 0.0
  %116 = vmatpush1.msra.mxu0 0.0
  %117 = vmatprep.subr.mxu0 0.0
  %118 = vmatpush1.msra.mxu0 0.0
  %119 = vmatprep.subr.mxu0 0.0
  %120 = vmatpush1.msra.mxu0 0.0
  %121 = vmatprep.subr.mxu0 0.0
  %122 = vmatpush1.msra.mxu0 0.0
  %123 = vmatprep.subr.mxu0 0.0
  %124 = vmatpush1.msra.mxu0 0.0
  %125 = vmatprep.subr.mxu0 0.0
  %126 = vmatpush1.msra.mxu0 0.0
  %127 = vmatprep.subr.mxu0 0.0
  %128 = vmatpush1.msra.mxu0 0.0
  %129 = vmatprep.subr.mxu0 0.0
  %130 = vmatpush1.msra.mxu0 0.0
  %131 = vmatprep.subr.mxu0 0.0
  %132 = vmatpush1.msra.mxu0 0.0
  %133 = vmatprep.subr.mxu0 0.0
  %134 = vmatpush1.msra.mxu0 0.0
  %135 = vmatprep.mubr.f32.mxu0 0.0
  %136 = vmatmul.mubr.f32.gmra.mrb[0].mxu0 %v56
  %v137 = vpop.f32.mrb[0].mxu0
  %v138 = vadd.f32 0.0, %v137
  %v139 = vpop.f32.mrb[0].mxu0
  %v140 = vadd.f32 0.0, %v139
  %141 = vdwg.mxu0
  %142 = vmatprep.subr.mxu0 %v36
  %143 = vmatpush1.msra.mxu0 %v35
  %144 = vmatprep.subr.mxu0 %v40
  %145 = vmatpush1.msra.mxu0 %v39
  %146 = vmatprep.subr.mxu0 %v44
  %147 = vmatpush1.msra.mxu0 %v43
  %148 = vmatprep.subr.mxu0 %v48
  %149 = vmatpush1.msra.mxu0 %v47
  %150 = vmatprep.subr.mxu0 %v69
  %151 = vmatpush1.msra.mxu0 %v66
  %152 = vmatprep.subr.mxu0 0.0
  %153 = vmatpush1.msra.mxu0 0.0
  %154 = vmatprep.subr.mxu0 0.0
  %155 = vmatpush1.msra.mxu0 0.0
  %156 = vmatprep.subr.mxu0 0.0
  %157 = vmatpush1.msra.mxu0 0.0
  %158 = vmatprep.subr.mxu0 0.0
  %159 = vmatpush1.msra.mxu0 0.0
  %160 = vmatprep.subr.mxu0 0.0
  %161 = vmatpush1.msra.mxu0 0.0
  %162 = vmatprep.subr.mxu0 0.0
  %163 = vmatpush1.msra.mxu0 0.0
  %164 = vmatprep.subr.mxu0 0.0
  %165 = vmatpush1.msra.mxu0 0.0
  %166 = vmatprep.subr.mxu0 0.0
  %167 = vmatpush1.msra.mxu0 0.0
  %168 = vmatprep.subr.mxu0 0.0
  %169 = vmatpush1.msra.mxu0 0.0
  %170 = vmatprep.subr.mxu0 0.0
  %171 = vmatpush1.msra.mxu0 0.0
  %172 = vmatprep.subr.mxu0 0.0
  %173 = vmatpush1.msra.mxu0 0.0
  %174 = vmatprep.subr.mxu0 0.0
  %175 = vmatpush1.msra.mxu0 0.0
  %176 = vmatprep.subr.mxu0 0.0
  %177 = vmatpush1.msra.mxu0 0.0
  %178 = vmatprep.subr.mxu0 0.0
  %179 = vmatpush1.msra.mxu0 0.0
  %180 = vmatprep.subr.mxu0 0.0
  %181 = vmatpush1.msra.mxu0 0.0
  %182 = vmatprep.subr.mxu0 0.0
  %183 = vmatpush1.msra.mxu0 0.0
  %184 = vmatprep.subr.mxu0 0.0
  %185 = vmatpush1.msra.mxu0 0.0
  %186 = vmatprep.subr.mxu0 0.0
  %187 = vmatpush1.msra.mxu0 0.0
  %188 = vmatprep.subr.mxu0 0.0
  %189 = vmatpush1.msra.mxu0 0.0
  %190 = vmatprep.subr.mxu0 0.0
  %191 = vmatpush1.msra.mxu0 0.0
  %192 = vmatprep.subr.mxu0 0.0
  %193 = vmatpush1.msra.mxu0 0.0
  %194 = vmatprep.subr.mxu0 0.0
  %195 = vmatpush1.msra.mxu0 0.0
  %196 = vmatprep.subr.mxu0 0.0
  %197 = vmatpush1.msra.mxu0 0.0
  %198 = vmatprep.subr.mxu0 0.0
  %199 = vmatpush1.msra.mxu0 0.0
  %200 = vmatprep.subr.mxu0 0.0
  %201 = vmatpush1.msra.mxu0 0.0
  %202 = vmatprep.subr.mxu0 0.0
  %203 = vmatpush1.msra.mxu0 0.0
  %204 = vmatprep.subr.mxu0 0.0
  %205 = vmatpush1.msra.mxu0 0.0
  %206 = vmatprep.mubr.f32.mxu0 0.0
  %207 = vmatmul.mubr.f32.gmra.mrb[0].mxu0 %v56
  %v208 = vpop.f32.mrb[0].mxu0
  %v209 = vadd.f32 0.0, %v208
  %v210 = vpop.f32.mrb[0].mxu0
  %v211 = vadd.f32 0.0, %v210
  %212 = vdwg.mxu0
  %v213 = vld [vmem:[%s2] sm:$0xf]
  %vm214 = vcmask 31744
  %v216 = vsel %vm214, %v213, 0
  %v219 = vsel %vm58, %v41, 0
  %v222 = vsel %vm58, %v42, 0
  %v225 = vsel %vm58, %v43, 0
  %v228 = vsel %vm58, %v44, 0
  %230 = vmatprep.subr.mxu0 %v222
  %231 = vmatpush1.msra.mxu0 %v219
  %232 = vmatprep.subr.mxu0 0.0
  %233 = vmatpush1.msra.mxu0 0.0
  %234 = vmatprep.subr.mxu0 0.0
  %235 = vmatpush1.msra.mxu0 0.0
  %236 = vmatprep.subr.mxu0 0.0
  %237 = vmatpush1.msra.mxu0 0.0
  %238 = vmatprep.subr.mxu0 0.0
  %239 = vmatpush1.msra.mxu0 0.0
  %240 = vmatprep.subr.mxu0 0.0
  %241 = vmatpush1.msra.mxu0 0.0
  %242 = vmatprep.subr.mxu0 0.0
  %243 = vmatpush1.msra.mxu0 0.0
  %244 = vmatprep.subr.mxu0 0.0
  %245 = vmatpush1.msra.mxu0 0.0
  %246 = vmatprep.subr.mxu0 0.0
  %247 = vmatpush1.msra.mxu0 0.0
  %248 = vmatprep.subr.mxu0 0.0
  %249 = vmatpush1.msra.mxu0 0.0
  %250 = vmatprep.subr.mxu0 0.0
  %251 = vmatpush1.msra.mxu0 0.0
  %252 = vmatprep.subr.mxu0 0.0
  %253 = vmatpush1.msra.mxu0 0.0
  %254 = vmatprep.subr.mxu0 0.0
  %255 = vmatpush1.msra.mxu0 0.0
  %256 = vmatprep.subr.mxu0 0.0
  %257 = vmatpush1.msra.mxu0 0.0
  %258 = vmatprep.subr.mxu0 0.0
  %259 = vmatpush1.msra.mxu0 0.0
  %260 = vmatprep.subr.mxu0 0.0
  %261 = vmatpush1.msra.mxu0 0.0
  %262 = vmatprep.subr.mxu0 0.0
  %263 = vmatpush1.msra.mxu0 0.0
  %264 = vmatprep.subr.mxu0 0.0
  %265 = vmatpush1.msra.mxu0 0.0
  %266 = vmatprep.subr.mxu0 0.0
  %267 = vmatpush1.msra.mxu0 0.0
  %268 = vmatprep.subr.mxu0 0.0
  %269 = vmatpush1.msra.mxu0 0.0
  %270 = vmatprep.subr.mxu0 0.0
  %271 = vmatpush1.msra.mxu0 0.0
  %272 = vmatprep.subr.mxu0 0.0
  %273 = vmatpush1.msra.mxu0 0.0
  %274 = vmatprep.subr.mxu0 0.0
  %275 = vmatpush1.msra.mxu0 0.0
  %276 = vmatprep.subr.mxu0 0.0
  %277 = vmatpush1.msra.mxu0 0.0
  %278 = vmatprep.subr.mxu0 0.0
  %279 = vmatpush1.msra.mxu0 0.0
  %280 = vmatprep.subr.mxu0 0.0
  %281 = vmatpush1.msra.mxu0 0.0
  %282 = vmatprep.subr.mxu0 0.0
  %283 = vmatpush1.msra.mxu0 0.0
  %284 = vmatprep.subr.mxu0 0.0
  %285 = vmatpush1.msra.mxu0 0.0
  %286 = vmatprep.subr.mxu0 0.0
  %287 = vmatpush1.msra.mxu0 0.0
  %288 = vmatprep.subr.mxu0 0.0
  %289 = vmatpush1.msra.mxu0 0.0
  %290 = vmatprep.subr.mxu0 0.0
  %291 = vmatpush1.msra.mxu0 0.0
  %292 = vmatprep.subr.mxu0 0.0
  %293 = vmatpush1.msra.mxu0 0.0
  %294 = vmatprep.mubr.f32.mxu0 0.0
  %295 = vmatmul.mubr.f32.gmra.mrb[0].mxu0 %v216
  %v296 = vpop.f32.mrb[0].mxu0
  %v297 = vadd.f32 0.0, %v296
  %v298 = vpop.f32.mrb[0].mxu0
  %v299 = vadd.f32 0.0, %v298
  %300 = vdwg.mxu0
  %301 = vmatprep.subr.mxu0 %v228
  %302 = vmatpush1.msra.mxu0 %v225
  %303 = vmatprep.subr.mxu0 0.0
  %304 = vmatpush1.msra.mxu0 0.0
  %305 = vmatprep.subr.mxu0 0.0
  %306 = vmatpush1.msra.mxu0 0.0
  %307 = vmatprep.subr.mxu0 0.0
  %308 = vmatpush1.msra.mxu0 0.0
  %309 = vmatprep.subr.mxu0 0.0
  %310 = vmatpush1.msra.mxu0 0.0
  %311 = vmatprep.subr.mxu0 0.0
  %312 = vmatpush1.msra.mxu0 0.0
  %313 = vmatprep.subr.mxu0 0.0
  %314 = vmatpush1.msra.mxu0 0.0
  %315 = vmatprep.subr.mxu0 0.0
  %316 = vmatpush1.msra.mxu0 0.0
  %317 = vmatprep.subr.mxu0 0.0
  %318 = vmatpush1.msra.mxu0 0.0
  %319 = vmatprep.subr.mxu0 0.0
  %320 = vmatpush1.msra.mxu0 0.0
  %321 = vmatprep.subr.mxu0 0.0
  %322 = vmatpush1.msra.mxu0 0.0
  %323 = vmatprep.subr.mxu0 0.0
  %324 = vmatpush1.msra.mxu0 0.0
  %325 = vmatprep.subr.mxu0 0.0
  %326 = vmatpush1.msra.mxu0 0.0
  %327 = vmatprep.subr.mxu0 0.0
  %328 = vmatpush1.msra.mxu0 0.0
  %329 = vmatprep.subr.mxu0 0.0
  %330 = vmatpush1.msra.mxu0 0.0
  %331 = vmatprep.subr.mxu0 0.0
  %332 = vmatpush1.msra.mxu0 0.0
  %333 = vmatprep.subr.mxu0 0.0
  %334 = vmatpush1.msra.mxu0 0.0
  %335 = vmatprep.subr.mxu0 0.0
  %336 = vmatpush1.msra.mxu0 0.0
  %337 = vmatprep.subr.mxu0 0.0
  %338 = vmatpush1.msra.mxu0 0.0
  %339 = vmatprep.subr.mxu0 0.0
  %340 = vmatpush1.msra.mxu0 0.0
  %341 = vmatprep.subr.mxu0 0.0
  %342 = vmatpush1.msra.mxu0 0.0
  %343 = vmatprep.subr.mxu0 0.0
  %344 = vmatpush1.msra.mxu0 0.0
  %345 = vmatprep.subr.mxu0 0.0
  %346 = vmatpush1.msra.mxu0 0.0
  %347 = vmatprep.subr.mxu0 0.0
  %348 = vmatpush1.msra.mxu0 0.0
  %349 = vmatprep.subr.mxu0 0.0
  %350 = vmatpush1.msra.mxu0 0.0
  %351 = vmatprep.subr.mxu0 0.0
  %352 = vmatpush1.msra.mxu0 0.0
  %353 = vmatprep.subr.mxu0 0.0
  %354 = vmatpush1.msra.mxu0 0.0
  %355 = vmatprep.subr.mxu0 0.0
  %356 = vmatpush1.msra.mxu0 0.0
  %357 = vmatprep.subr.mxu0 0.0
  %358 = vmatpush1.msra.mxu0 0.0
  %359 = vmatprep.subr.mxu0 0.0
  %360 = vmatpush1.msra.mxu0 0.0
  %361 = vmatprep.subr.mxu0 0.0
  %362 = vmatpush1.msra.mxu0 0.0
  %363 = vmatprep.subr.mxu0 0.0
  %364 = vmatpush1.msra.mxu0 0.0
  %365 = vmatprep.mubr.f32.mxu0 0.0
  %366 = vmatmul.mubr.f32.gmra.mrb[0].mxu0 %v216
  %v367 = vpop.f32.mrb[0].mxu0
  %v368 = vadd.f32 0.0, %v367
  %v369 = vpop.f32.mrb[0].mxu0
  %v370 = vadd.f32 0.0, %v369
  %371 = vdwg.mxu0
  %v376 = vrot.slane %v33, 4
  %v377 = vrot.slane %v34, 4
  %v378 = vrot.slane %v35, 4
  %v379 = vrot.slane %v36, 4
  %v384 = vadd.f32 %v33, %v376
  %v385 = vadd.f32 %v34, %v377
  %v386 = vadd.f32 %v35, %v378
  %v387 = vadd.f32 %v36, %v379
  %v388 = vadd.f32 %v384, %v37
  %v389 = vadd.f32 %v385, %v38
  %v390 = vadd.f32 %v386, %v39
  %v391 = vadd.f32 %v387, %v40
  %v396 = vrot.slane %v37, 4
  %v397 = vrot.slane %v38, 4
  %v398 = vrot.slane %v39, 4
  %v399 = vrot.slane %v40, 4
  %v404 = vadd.f32 %v388, %v396
  %v405 = vadd.f32 %v389, %v397
  %v406 = vadd.f32 %v390, %v398
  %v407 = vadd.f32 %v391, %v399
  %v408 = vadd.f32 %v404, %v41
  %v409 = vadd.f32 %v405, %v42
  %v410 = vadd.f32 %v406, %v43
  %v411 = vadd.f32 %v407, %v44
  %v412 = vrot.slane %v41, 4
  %v413 = vrot.slane %v42, 4
  %v414 = vrot.slane %v43, 4
  %v415 = vrot.slane %v44, 4
  %v420 = vadd.f32 %v408, %v412
  %v421 = vadd.f32 %v409, %v413
  %v422 = vadd.f32 %v410, %v414
  %v423 = vadd.f32 %v411, %v415
  %v424 = vadd.f32 %v420, %v45
  %v425 = vadd.f32 %v421, %v46
  %v426 = vadd.f32 %v422, %v47
  %v427 = vadd.f32 %v423, %v48
  %v432 = vrot.slane %v45, 4
  %v433 = vrot.slane %v46, 4
  %v434 = vrot.slane %v47, 4
  %v435 = vrot.slane %v48, 4
  %v440 = vadd.f32 %v424, %v432
  %v441 = vadd.f32 %v425, %v433
  %v442 = vadd.f32 %v426, %v434
  %v443 = vadd.f32 %v427, %v435
  %v444 = vadd.f32 %v440, %v49
  %v445 = vadd.f32 %v441, %v50
  %v446 = vadd.f32 %v442, %v51
  %v447 = vadd.f32 %v443, %v52
  %v449 = vlaneseq
  %v450 = vshrl.u32 %v449, 7
  %v451 = vsub.s32 0, %v450
  %v452 = vrot.slane %v32, %v451
  %453 = vset.pattern.permute.xlu0 0
  %454 = vperm.xlu0 %453, %v452
  %v455 = vpop.permute.xlu0 %454
  %v457 = vmul.f32 %v455, %v41
  %v458 = vmul.f32 %v455, %v42
  %v459 = vmul.f32 %v455, %v43
  %v460 = vmul.f32 %v455, %v44
  %461 = vset.pattern.permute.xlu0 1
  %462 = vperm.xlu0 %461, %v452
  %v463 = vpop.permute.xlu0 %462
  %v465 = vmul.f32 %v463, %v297
  %v466 = vmul.f32 %v463, %v299
  %v467 = vmul.f32 %v463, %v368
  %v468 = vmul.f32 %v463, %v370
  %v469 = vadd.f32 %v457, %v465
  %v470 = vadd.f32 %v458, %v466
  %v471 = vadd.f32 %v459, %v467
  %v472 = vadd.f32 %v460, %v468
  %473 = vset.pattern.permute.xlu0 2
  %474 = vperm.xlu0 %473, %v452
  %v475 = vpop.permute.xlu0 %474
  %v477 = vmul.f32 %v475, %v138
  %v478 = vmul.f32 %v475, %v140
  %v479 = vmul.f32 %v475, %v209
  %v480 = vmul.f32 %v475, %v211
  %v481 = vadd.f32 %v469, %v477
  %v482 = vadd.f32 %v470, %v478
  %v483 = vadd.f32 %v471, %v479
  %v484 = vadd.f32 %v472, %v480
  %v485 = vld [vmem:[%s3] sm:$0xf]
  %486 = vset.pattern.permute.xlu0 3
  %487 = vperm.xlu0 %486, %v32
  %v488 = vpop.permute.xlu0 %487
  %v490 = vlaneseq
  %v491 = vshrl.u32 %v490, 7
  %v492 = vsub.s32 0, %v491
  %v493 = vrot.slane %v488, %v492
  %v494 = vmul.f32 %v493, %v485
  %v496 = vlaneseq
  %v497 = vshrl.u32 %v496, 7
  %v498 = vsub.s32 0, %v497
  %v499 = vrot.slane %v494, %v498
  %v500 = vlaneseq
  %v501 = vshrl.u32 %v500, 7
  %v502 = vsub.s32 1, %v501
  %v503 = vrot.slane %v494, %v502
  %v504 = vlaneseq
  %v505 = vshrl.u32 %v504, 7
  %v506 = vsub.s32 2, %v505
  %v507 = vrot.slane %v494, %v506
  %v508 = vlaneseq
  %v509 = vshrl.u32 %v508, 7
  %v510 = vsub.s32 3, %v509
  %v511 = vrot.slane %v494, %v510
  %v516 = vmul.f32 %v499, %v444
  %v517 = vmul.f32 %v503, %v445
  %v518 = vmul.f32 %v507, %v446
  %v519 = vmul.f32 %v511, %v447
  %v520 = vadd.f32 %v481, %v516
  %v521 = vadd.f32 %v482, %v517
  %v522 = vadd.f32 %v483, %v518
  %v523 = vadd.f32 %v484, %v519
  %v528 = vcombine.low %v520, %v521
  %v529 = vcombine.low %v522, %v523
  %532 = vst [vmem:[%s5] sm:$0xff] %v528
  %533 = vst [vmem:[%s5 + $0x8] sm:$0xff] %v529
  // Predicated region
  $region22: #{mixed_op_forward.1} parent=0 // pred_check
    _
  $region23: #{mixed_op_forward.1} parent=0 // pred_check_branch
    %535 = sbr.rel (0) target = $region25
  $region24: #{mixed_op_forward.1} parent=0 // pred_region
    _
  $region25: #{mixed_op_forward.1} parent=0 // pred_fallthru
    _
  // Predicated region
  $region26: #{mixed_op_forward.1} parent=0 // pred_check
    _
  $region27: #{mixed_op_forward.1} parent=0 // pred_check_branch
    %537 = sbr.rel (0) target = $region29
  $region28: #{mixed_op_forward.1} parent=0 // pred_region
    _
  $region29: #{mixed_op_forward.1} parent=0 // pred_fallthru
    _

</llo_original>
